<compile_context>
chip_gen: v5e
topology: v5e:2x2
jax: 0.10.0
libtpu: 0.0.40
codegen_flags: <defaults>
</compile_context>

<pallas_src>
import jax
import jax.numpy as jnp
from jax.experimental import pallas as pl
from jax.experimental.pallas import tpu as pltpu

KH = KW = 3
PAD = 1
LANE = 128
SUBLANE = 8


def _round_up(x, m):
    return (x + m - 1) // m * m


# ----------------------------- Pallas kernel ------------------------------- #

def fused_conv_pool_linear_kernel(p_ref, cw_ref, cb_ref, avg_ref, lw_ref,
                                  lb_ref, o_ref):
    # p_ref   : (B*HW, KKC_pad)     bf16  im2col patches, batch folded into M
    # cw_ref  : (KKC_pad, COUT_pad) bf16  flattened conv weight (zero-padded)
    # cb_ref  : (1, COUT_pad)       f32   conv bias (zero-padded)
    # avg_ref : (B_pad, B*HW)       bf16  block-diag averaging matrix (1/HW)
    # lw_ref  : (COUT_pad, D_pad)   bf16  linear weight transposed (y = x @ W.T)
    # lb_ref  : (1, D_pad)          f32   linear bias (zero-padded)
    # o_ref   : (B_pad, D_pad)      f32   final output, lane-dense

    # Conv as one MXU matmul (bf16 in, f32 accumulate) + bias + ReLU.
    acc = jnp.dot(p_ref[...], cw_ref[...],
                  preferred_element_type=jnp.float32)            # (B*HW, COUT_pad)
    feat = jnp.maximum(acc + cb_ref[...], 0.0)                   # f32

    # Global average pool on the MXU: (B_pad, B*HW) @ (B*HW, COUT_pad).
    pooled = jnp.dot(avg_ref[...], feat.astype(avg_ref.dtype),
                     preferred_element_type=jnp.float32)         # (B_pad, COUT_pad)

    # Linear: (B_pad, COUT_pad) @ (COUT_pad, D_pad) + bias.
    y = jnp.dot(pooled.astype(lw_ref.dtype), lw_ref[...],
                preferred_element_type=jnp.float32)
    o_ref[...] = (y + lb_ref[...]).astype(o_ref.dtype)


# ------------------------------- glue (JAX) -------------------------------- #

def im2col_nhwc(x_nhwc):
    # TODO(synk): at production H/W/Cin this 9x-expanded im2col should move
    # into the kernel to avoid the HBM-traffic blowup; at toy sizes it is noise.
    B, H, W, C = x_nhwc.shape
    xp = jnp.pad(x_nhwc, ((0, 0), (PAD, PAD), (PAD, PAD), (0, 0)))
    cols = []
    for i in range(KH):
        for j in range(KW):
            cols.append(xp[:, i:i + H, j:j + W, :])
    patches = jnp.concatenate(cols, axis=-1)        # feature order (kh, kw, cin)
    return patches.reshape(B, H * W, KH * KW * C)


def pytorch_model_forward(x_nchw, conv_w, conv_b, lin_w, lin_b):
    """Forward pass of the reconstructed graph (see header comment)."""
    B, Cin, H, W = x_nchw.shape
    Cout = conv_w.shape[0]
    D = lin_w.shape[0]
    HW = H * W
    KKC = KH * KW * Cin

    KKC_pad = _round_up(KKC, LANE)
    COUT_pad = _round_up(Cout, LANE)
    D_pad = _round_up(D, LANE)
    B_pad = _round_up(B, SUBLANE)

    # Graph plumbing (im2col, transposes, zero-padding, dtype casts): JAX glue.
    x_nhwc = jnp.transpose(x_nchw, (0, 2, 3, 1))
    patches = im2col_nhwc(x_nhwc).reshape(B * HW, KKC)           # batch folded into M
    patches = jnp.pad(patches, ((0, 0), (0, KKC_pad - KKC))).astype(jnp.bfloat16)

    # torch conv weight (Cout, Cin, KH, KW) -> (kh, kw, cin) flat x Cout, padded.
    cw = jnp.transpose(conv_w, (2, 3, 1, 0)).reshape(KKC, Cout)
    cw = jnp.pad(cw, ((0, KKC_pad - KKC), (0, COUT_pad - Cout))).astype(jnp.bfloat16)
    cb = jnp.pad(conv_b, (0, COUT_pad - Cout)).reshape(1, COUT_pad).astype(jnp.float32)

    # Block-diagonal averaging matrix: avg[b, b*HW:(b+1)*HW] = 1/HW for b < B,
    # zero rows for the padded batch slots.  1/HW (HW a power of two) is exact
    # in bf16, so the pool is unbiased.
    row_id = jnp.arange(B_pad, dtype=jnp.int32)[:, None]
    col_batch = (jnp.arange(B * HW, dtype=jnp.int32) // HW)[None, :]
    avg = jnp.where(row_id == col_batch, 1.0 / HW, 0.0).astype(jnp.bfloat16)

    # torch Linear: y = x @ W.T + b
    lw = jnp.pad(jnp.transpose(lin_w),
                 ((0, COUT_pad - Cout), (0, D_pad - D))).astype(jnp.bfloat16)
    lb = jnp.pad(lin_b, (0, D_pad - D)).reshape(1, D_pad).astype(jnp.float32)

    # Single-step kernel: whole (tiny) operands live in VMEM, one launch,
    # three chained MXU matmuls, lane-dense unmasked output store.
    out_pad = pl.pallas_call(
        fused_conv_pool_linear_kernel,
        out_shape=jax.ShapeDtypeStruct((B_pad, D_pad), jnp.float32),
        compiler_params=pltpu.CompilerParams(
            vmem_limit_bytes=16 * 1024 * 1024),  # well under v5e's scoped default
    )(patches, cw, cb, avg, lw, lb)

    return out_pad[:B, :D]


def reference_forward(x_nchw, conv_w, conv_b, lin_w, lin_b):
    y = jax.lax.conv_general_dilated(
        x_nchw, conv_w, window_strides=(1, 1), padding=((PAD, PAD), (PAD, PAD)),
        dimension_numbers=("NCHW", "OIHW", "NCHW"))
    y = y + conv_b.reshape(1, -1, 1, 1)
    y = jnp.maximum(y, 0.0)
    pooled = jnp.mean(y, axis=(2, 3))
    return pooled @ lin_w.T + lin_b


# ---------------------------------- main ----------------------------------- #

if __name__ == "__main__":
    B, Cin, H, W = 2, 4, 16, 16
    Cout, D = 8, 16

    key = jax.random.PRNGKey(0)
    kx, kcw, kcb, klw, klb = jax.random.split(key, 5)
    x = jax.random.normal(kx, (B, Cin, H, W), dtype=jnp.float32)
    conv_w = 0.1 * jax.random.normal(kcw, (Cout, Cin, KH, KW), dtype=jnp.float32)
    conv_b = 0.1 * jax.random.normal(kcb, (Cout,), dtype=jnp.float32)
    lin_w = 0.1 * jax.random.normal(klw, (D, Cout), dtype=jnp.float32)
    lin_b = 0.1 * jax.random.normal(klb, (D,), dtype=jnp.float32)

    out = jax.jit(pytorch_model_forward)(x, conv_w, conv_b, lin_w, lin_b)
    out = jax.block_until_ready(out)

    ref = reference_forward(x, conv_w, conv_b, lin_w, lin_b)
    assert out.shape == (B, D)
    assert bool(jnp.all(jnp.isfinite(out)))
    assert bool(jnp.allclose(out, ref, atol=5e-2, rtol=5e-2))

    print("KERNEL_OK")
</pallas_src>

<mosaic_0001>
module attributes {stable_mosaic.version = 11 : i64} {
  func.func @fused_conv_pool_linear_kernel(%arg0: memref<512x128xbf16, #tpu.memory_space<vmem>>, %arg1: memref<128x128xbf16, #tpu.memory_space<vmem>>, %arg2: memref<1x128xf32, #tpu.memory_space<vmem>>, %arg3: memref<8x512xbf16, #tpu.memory_space<vmem>>, %arg4: memref<128x128xbf16, #tpu.memory_space<vmem>>, %arg5: memref<1x128xf32, #tpu.memory_space<vmem>>, %arg6: memref<8x128xf32, #tpu.memory_space<vmem>>) attributes {dimension_semantics = [], scalar_prefetch = 0 : i64, scratch_operands = 0 : i64, tpu.core_type = #tpu.core_type<tc>} {
    %c0 = arith.constant 0 : index
    %c0_0 = arith.constant 0 : index
    %0 = vector.load %arg0[%c0, %c0_0] : memref<512x128xbf16, #tpu.memory_space<vmem>>, vector<512x128xbf16>
    %c0_1 = arith.constant 0 : index
    %c0_2 = arith.constant 0 : index
    %1 = vector.load %arg1[%c0_1, %c0_2] : memref<128x128xbf16, #tpu.memory_space<vmem>>, vector<128x128xbf16>
    %cst = arith.constant dense<0.000000e+00> : vector<512x128xf32>
    %2 = tpu.matmul %0, %1, %cst {dimension_numbers = #tpu.dot_dimension_numbers<[1], [0], [0], [1], [0, 0, 1, 1], [], []>} : vector<512x128xbf16>, vector<128x128xbf16>, vector<512x128xf32> -> vector<512x128xf32>
    %c0_3 = arith.constant 0 : index
    %c0_4 = arith.constant 0 : index
    %3 = vector.load %arg2[%c0_3, %c0_4] : memref<1x128xf32, #tpu.memory_space<vmem>>, vector<1x128xf32>
    %4 = vector.broadcast %3 : vector<1x128xf32> to vector<512x128xf32>
    %5 = arith.addf %2, %4 : vector<512x128xf32>
    %cst_5 = arith.constant 0.000000e+00 : f32
    %6 = vector.broadcast %cst_5 : f32 to vector<512x128xf32>
    %7 = arith.maximumf %5, %6 : vector<512x128xf32>
    %c0_6 = arith.constant 0 : index
    %c0_7 = arith.constant 0 : index
    %8 = vector.load %arg3[%c0_6, %c0_7] : memref<8x512xbf16, #tpu.memory_space<vmem>>, vector<8x512xbf16>
    %9 = arith.truncf %7 : vector<512x128xf32> to vector<512x128xbf16>
    %cst_8 = arith.constant dense<0.000000e+00> : vector<8x128xf32>
    %10 = tpu.matmul %8, %9, %cst_8 {dimension_numbers = #tpu.dot_dimension_numbers<[1], [0], [0], [1], [0, 0, 1, 1], [], []>} : vector<8x512xbf16>, vector<512x128xbf16>, vector<8x128xf32> -> vector<8x128xf32>
    %11 = arith.truncf %10 : vector<8x128xf32> to vector<8x128xbf16>
    %c0_9 = arith.constant 0 : index
    %c0_10 = arith.constant 0 : index
    %12 = vector.load %arg4[%c0_9, %c0_10] : memref<128x128xbf16, #tpu.memory_space<vmem>>, vector<128x128xbf16>
    %cst_11 = arith.constant dense<0.000000e+00> : vector<8x128xf32>
    %13 = tpu.matmul %11, %12, %cst_11 {dimension_numbers = #tpu.dot_dimension_numbers<[1], [0], [0], [1], [0, 0, 1, 1], [], []>} : vector<8x128xbf16>, vector<128x128xbf16>, vector<8x128xf32> -> vector<8x128xf32>
    %c0_12 = arith.constant 0 : index
    %c0_13 = arith.constant 0 : index
    %14 = vector.load %arg5[%c0_12, %c0_13] : memref<1x128xf32, #tpu.memory_space<vmem>>, vector<1x128xf32>
    %15 = vector.broadcast %14 : vector<1x128xf32> to vector<8x128xf32>
    %16 = arith.addf %13, %15 : vector<8x128xf32>
    %c0_14 = arith.constant 0 : index
    %c0_15 = arith.constant 0 : index
    %17 = vector.load %arg6[%c0_14, %c0_15] : memref<8x128xf32, #tpu.memory_space<vmem>>, vector<8x128xf32>
    tpu.vector_store %arg6[%c0_14, %c0_15], %16 {strides = array<i32>} : memref<8x128xf32, #tpu.memory_space<vmem>>, vector<8x128xf32>,
    return
  }
}

</mosaic_0001>

<llo_original>
// kernel: pytorch_model_forward.1
$region0: #{pytorch_model_forward.1}
  #allocation0 [shape = 'u32[]', space=smem, size = 0x4, offset = 0x4, fixed_abs, tag = 'smem constant byte address 0x4 - core index']
  #allocation1 [shape = 'u32[72,128]{1,0:T(1,128)}', space=vmem, size = 0x9000, scoped, tag = 'internal scratch']
  %s0 = inlined_call_operand.vmem [shape: bf16[512,128], index: 0, kind: input, shape index: {}]
  %s1 = inlined_call_operand.vmem [shape: bf16[128,128], index: 1, kind: input, shape index: {}]
  %s2 = inlined_call_operand.vmem [shape: f32[1,128], index: 2, kind: input, shape index: {}]
  %s3 = inlined_call_operand.vmem [shape: bf16[8,512], index: 3, kind: input, shape index: {}]
  %s4 = inlined_call_operand.vmem [shape: bf16[128,128], index: 4, kind: input, shape index: {}]
  %s5 = inlined_call_operand.vmem [shape: f32[1,128], index: 5, kind: input, shape index: {}]
  %s6 = inlined_call_operand.vmem [shape: f32[8,128], index: 6, kind: output, shape index: {}]
  %s7 = sld [smem:[#allocation0]]
  $region34: #{pytorch_model_forward.1} parent=0
    _
  %s9 = ssub.s32 1, %s7
  %s10 = scalar_select 0, %s9, %s7
  // Predicated region
  $region2: #{pytorch_model_forward.1} parent=0 // pred_check
    _
  $region3: #{pytorch_model_forward.1} parent=0 // pred_check_branch
    %12 = sbr.rel (0) target = $region5
  $region4: #{pytorch_model_forward.1} parent=0 // pred_region
    _
  $region5: #{pytorch_model_forward.1} parent=0 // pred_fallthru
    _
  // Predicated region
  $region6: #{pytorch_model_forward.1} parent=0 // pred_check
    _
  $region7: #{pytorch_model_forward.1} parent=0 // pred_check_branch
    %14 = sbr.rel (0) target = $region9
  $region8: #{pytorch_model_forward.1} parent=0 // pred_region
    _
  $region9: #{pytorch_model_forward.1} parent=0 // pred_fallthru
    _
  // Predicated region
  $region10: #{pytorch_model_forward.1} parent=0 // pred_check
    _
  $region11: #{pytorch_model_forward.1} parent=0 // pred_check_branch
    %16 = sbr.rel (0) target = $region13
  $region12: #{pytorch_model_forward.1} parent=0 // pred_region
    _
  $region13: #{pytorch_model_forward.1} parent=0 // pred_fallthru
    _
  // Predicated region
  $region14: #{pytorch_model_forward.1} parent=0 // pred_check
    _
  $region15: #{pytorch_model_forward.1} parent=0 // pred_check_branch
    %18 = sbr.rel (0) target = $region17
  $region16: #{pytorch_model_forward.1} parent=0 // pred_region
    _
  $region17: #{pytorch_model_forward.1} parent=0 // pred_fallthru
    _
  // Predicated region
  $region18: #{pytorch_model_forward.1} parent=0 // pred_check
    _
  $region19: #{pytorch_model_forward.1} parent=0 // pred_check_branch
    %20 = sbr.rel (0) target = $region21
  $region20: #{pytorch_model_forward.1} parent=0 // pred_region
    _
  $region21: #{pytorch_model_forward.1} parent=0 // pred_fallthru
    _
  // Predicated region
  $region22: #{pytorch_model_forward.1} parent=0 // pred_check
    _
  $region23: #{pytorch_model_forward.1} parent=0 // pred_check_branch
    %22 = sbr.rel (0) target = $region25
  $region24: #{pytorch_model_forward.1} parent=0 // pred_region
    _
  $region25: #{pytorch_model_forward.1} parent=0 // pred_fallthru
    _
  %v23 = vld [vmem:[%s0] sm:$0xf]
  %v24 = vld [vmem:[%s0 + $0x4] sm:$0xf]
  %v25 = vld [vmem:[%s0 + $0x8] sm:$0xf]
  %v26 = vld [vmem:[%s0 + $0xc] sm:$0xf]
  %v27 = vld [vmem:[%s0 + $0x10] sm:$0xf]
  %v28 = vld [vmem:[%s0 + $0x14] sm:$0xf]
  %v29 = vld [vmem:[%s0 + $0x18] sm:$0xf]
  %v30 = vld [vmem:[%s0 + $0x1c] sm:$0xf]
  %v31 = vld [vmem:[%s0 + $0x20] sm:$0xf]
  %v32 = vld [vmem:[%s0 + $0x24] sm:$0xf]
  %v33 = vld [vmem:[%s0 + $0x28] sm:$0xf]
  %v34 = vld [vmem:[%s0 + $0x2c] sm:$0xf]
  %v35 = vld [vmem:[%s0 + $0x30] sm:$0xf]
  %v36 = vld [vmem:[%s0 + $0x34] sm:$0xf]
  %v37 = vld [vmem:[%s0 + $0x38] sm:$0xf]
  %v38 = vld [vmem:[%s0 + $0x3c] sm:$0xf]
  %v39 = vld [vmem:[%s0 + $0x40] sm:$0xf]
  %v40 = vld [vmem:[%s0 + $0x44] sm:$0xf]
  %v41 = vld [vmem:[%s0 + $0x48] sm:$0xf]
  %v42 = vld [vmem:[%s0 + $0x4c] sm:$0xf]
  %v43 = vld [vmem:[%s0 + $0x50] sm:$0xf]
  %v44 = vld [vmem:[%s0 + $0x54] sm:$0xf]
  %v45 = vld [vmem:[%s0 + $0x58] sm:$0xf]
  %v46 = vld [vmem:[%s0 + $0x5c] sm:$0xf]
  %v47 = vld [vmem:[%s0 + $0x60] sm:$0xf]
  %v48 = vld [vmem:[%s0 + $0x64] sm:$0xf]
  %v49 = vld [vmem:[%s0 + $0x68] sm:$0xf]
  %v50 = vld [vmem:[%s0 + $0x6c] sm:$0xf]
  %v51 = vld [vmem:[%s0 + $0x70] sm:$0xf]
  %v52 = vld [vmem:[%s0 + $0x74] sm:$0xf]
  %v53 = vld [vmem:[%s0 + $0x78] sm:$0xf]
  %v54 = vld [vmem:[%s0 + $0x7c] sm:$0xf]
  %v55 = vld [vmem:[%s0 + $0x80] sm:$0xf]
  %v56 = vld [vmem:[%s0 + $0x84] sm:$0xf]
  %v57 = vld [vmem:[%s0 + $0x88] sm:$0xf]
  %v58 = vld [vmem:[%s0 + $0x8c] sm:$0xf]
  %v59 = vld [vmem:[%s0 + $0x90] sm:$0xf]
  %v60 = vld [vmem:[%s0 + $0x94] sm:$0xf]
  %v61 = vld [vmem:[%s0 + $0x98] sm:$0xf]
  %v62 = vld [vmem:[%s0 + $0x9c] sm:$0xf]
  %v63 = vld [vmem:[%s0 + $0xa0] sm:$0xf]
  %v64 = vld [vmem:[%s0 + $0xa4] sm:$0xf]
  %v65 = vld [vmem:[%s0 + $0xa8] sm:$0xf]
  %v66 = vld [vmem:[%s0 + $0xac] sm:$0xf]
  %v67 = vld [vmem:[%s0 + $0xb0] sm:$0xf]
  %v68 = vld [vmem:[%s0 + $0xb4] sm:$0xf]
  %v69 = vld [vmem:[%s0 + $0xb8] sm:$0xf]
  %v70 = vld [vmem:[%s0 + $0xbc] sm:$0xf]
  %v71 = vld [vmem:[%s0 + $0xc0] sm:$0xf]
  %v72 = vld [vmem:[%s0 + $0xc4] sm:$0xf]
  %v73 = vld [vmem:[%s0 + $0xc8] sm:$0xf]
  %v74 = vld [vmem:[%s0 + $0xcc] sm:$0xf]
  %v75 = vld [vmem:[%s0 + $0xd0] sm:$0xf]
  %v76 = vld [vmem:[%s0 + $0xd4] sm:$0xf]
  %v77 = vld [vmem:[%s0 + $0xd8] sm:$0xf]
  %v78 = vld [vmem:[%s0 + $0xdc] sm:$0xf]
  %v79 = vld [vmem:[%s0 + $0xe0] sm:$0xf]
  %v80 = vld [vmem:[%s0 + $0xe4] sm:$0xf]
  %v81 = vld [vmem:[%s0 + $0xe8] sm:$0xf]
  %v82 = vld [vmem:[%s0 + $0xec] sm:$0xf]
  %v83 = vld [vmem:[%s0 + $0xf0] sm:$0xf]
  %v84 = vld [vmem:[%s0 + $0xf4] sm:$0xf]
  %v85 = vld [vmem:[%s0 + $0xf8] sm:$0xf]
  %v86 = vld [vmem:[%s0 + $0xfc] sm:$0xf]
  %v87 = vld [vmem:[%s1] sm:$0xf]
  %v88 = vld [vmem:[%s1 + $0x4] sm:$0xf]
  %v89 = vld [vmem:[%s1 + $0x8] sm:$0xf]
  %v90 = vld [vmem:[%s1 + $0xc] sm:$0xf]
  %v91 = vld [vmem:[%s1 + $0x10] sm:$0xf]
  %v92 = vld [vmem:[%s1 + $0x14] sm:$0xf]
  %v93 = vld [vmem:[%s1 + $0x18] sm:$0xf]
  %v94 = vld [vmem:[%s1 + $0x1c] sm:$0xf]
  %v95 = vld [vmem:[%s1 + $0x20] sm:$0xf]
  %v96 = vld [vmem:[%s1 + $0x24] sm:$0xf]
  %v97 = vld [vmem:[%s1 + $0x28] sm:$0xf]
  %v98 = vld [vmem:[%s1 + $0x2c] sm:$0xf]
  %v99 = vld [vmem:[%s1 + $0x30] sm:$0xf]
  %v100 = vld [vmem:[%s1 + $0x34] sm:$0xf]
  %v101 = vld [vmem:[%s1 + $0x38] sm:$0xf]
  %v102 = vld [vmem:[%s1 + $0x3c] sm:$0xf]
  %v103 = vld [vmem:[%s2] sm:$0x1]
  %v105 = vperm.slane %v103, 0
  %v171 = vunpack.c.l.b16 %v23
  %v172 = vunpack.c.l.b16 %v24
  %v173 = vunpack.c.l.b16 %v25
  %v174 = vunpack.c.l.b16 %v26
  %v175 = vunpack.c.l.b16 %v27
  %v176 = vunpack.c.l.b16 %v28
  %v177 = vunpack.c.l.b16 %v29
  %v178 = vunpack.c.l.b16 %v30
  %v179 = vunpack.c.l.b16 %v31
  %v180 = vunpack.c.l.b16 %v32
  %v181 = vunpack.c.l.b16 %v33
  %v182 = vunpack.c.l.b16 %v34
  %v183 = vunpack.c.l.b16 %v35
  %v184 = vunpack.c.l.b16 %v36
  %v185 = vunpack.c.l.b16 %v37
  %v186 = vunpack.c.l.b16 %v38
  %v187 = vunpack.c.l.b16 %v39
  %v188 = vunpack.c.l.b16 %v40
  %v189 = vunpack.c.l.b16 %v41
  %v190 = vunpack.c.l.b16 %v42
  %v191 = vunpack.c.l.b16 %v43
  %v192 = vunpack.c.l.b16 %v44
  %v193 = vunpack.c.l.b16 %v45
  %v194 = vunpack.c.l.b16 %v46
  %v195 = vunpack.c.l.b16 %v47
  %v196 = vunpack.c.l.b16 %v48
  %v197 = vunpack.c.l.b16 %v49
  %v198 = vunpack.c.l.b16 %v50
  %v199 = vunpack.c.l.b16 %v51
  %v200 = vunpack.c.l.b16 %v52
  %v201 = vunpack.c.l.b16 %v53
  %v202 = vunpack.c.l.b16 %v54
  %v203 = vunpack.c.l.b16 %v55
  %v204 = vunpack.c.l.b16 %v56
  %v205 = vunpack.c.l.b16 %v57
  %v206 = vunpack.c.l.b16 %v58
  %v207 = vunpack.c.l.b16 %v59
  %v208 = vunpack.c.l.b16 %v60
  %v209 = vunpack.c.l.b16 %v61
  %v210 = vunpack.c.l.b16 %v62
  %v211 = vunpack.c.l.b16 %v63
  %v212 = vunpack.c.l.b16 %v64
  %v213 = vunpack.c.l.b16 %v65
  %v214 = vunpack.c.l.b16 %v66
  %v215 = vunpack.c.l.b16 %v67
  %v216 = vunpack.c.l.b16 %v68
  %v217 = vunpack.c.l.b16 %v69
  %v218 = vunpack.c.l.b16 %v70
  %v219 = vunpack.c.l.b16 %v71
  %v220 = vunpack.c.l.b16 %v72
  %v221 = vunpack.c.l.b16 %v73
  %v222 = vunpack.c.l.b16 %v74
  %v223 = vunpack.c.l.b16 %v75
  %v224 = vunpack.c.l.b16 %v76
  %v225 = vunpack.c.l.b16 %v77
  %v226 = vunpack.c.l.b16 %v78
  %v227 = vunpack.c.l.b16 %v79
  %v228 = vunpack.c.l.b16 %v80
  %v229 = vunpack.c.l.b16 %v81
  %v230 = vunpack.c.l.b16 %v82
  %v231 = vunpack.c.l.b16 %v83
  %v232 = vunpack.c.l.b16 %v84
  %v233 = vunpack.c.l.b16 %v85
  %v234 = vunpack.c.l.b16 %v86
  %v235 = vpack.c.b16 %v172, %v171
  %v236 = vpack.c.b16 %v174, %v173
  %v237 = vpack.c.b16 %v176, %v175
  %v238 = vpack.c.b16 %v178, %v177
  %v239 = vpack.c.b16 %v180, %v179
  %v240 = vpack.c.b16 %v182, %v181
  %v241 = vpack.c.b16 %v184, %v183
  %v242 = vpack.c.b16 %v186, %v185
  %v243 = vpack.c.b16 %v188, %v187
  %v244 = vpack.c.b16 %v190, %v189
  %v245 = vpack.c.b16 %v192, %v191
  %v246 = vpack.c.b16 %v194, %v193
  %v247 = vpack.c.b16 %v196, %v195
  %v248 = vpack.c.b16 %v198, %v197
  %v249 = vpack.c.b16 %v200, %v199
  %v250 = vpack.c.b16 %v202, %v201
  %v251 = vpack.c.b16 %v204, %v203
  %v252 = vpack.c.b16 %v206, %v205
  %v253 = vpack.c.b16 %v208, %v207
  %v254 = vpack.c.b16 %v210, %v209
  %v255 = vpack.c.b16 %v212, %v211
  %v256 = vpack.c.b16 %v214, %v213
  %v257 = vpack.c.b16 %v216, %v215
  %v258 = vpack.c.b16 %v218, %v217
  %v259 = vpack.c.b16 %v220, %v219
  %v260 = vpack.c.b16 %v222, %v221
  %v261 = vpack.c.b16 %v224, %v223
  %v262 = vpack.c.b16 %v226, %v225
  %v263 = vpack.c.b16 %v228, %v227
  %v264 = vpack.c.b16 %v230, %v229
  %v265 = vpack.c.b16 %v232, %v231
  %v266 = vpack.c.b16 %v234, %v233
  %v315 = vunpack.c.l.b16 %v87
  %v316 = vunpack.c.l.b16 %v88
  %v317 = vunpack.c.l.b16 %v89
  %v318 = vunpack.c.l.b16 %v90
  %v319 = vunpack.c.l.b16 %v91
  %v320 = vunpack.c.l.b16 %v92
  %v321 = vunpack.c.l.b16 %v93
  %v322 = vunpack.c.l.b16 %v94
  %v323 = vunpack.c.l.b16 %v95
  %v324 = vunpack.c.l.b16 %v96
  %v325 = vunpack.c.l.b16 %v97
  %v326 = vunpack.c.l.b16 %v98
  %v327 = vunpack.c.l.b16 %v99
  %v328 = vunpack.c.l.b16 %v100
  %v329 = vunpack.c.l.b16 %v101
  %v330 = vunpack.c.l.b16 %v102
  %v331 = vpack.c.b16 %v316, %v315
  %v332 = vpack.c.b16 %v318, %v317
  %v333 = vpack.c.b16 %v320, %v319
  %v334 = vpack.c.b16 %v322, %v321
  %v335 = vpack.c.b16 %v324, %v323
  %v336 = vpack.c.b16 %v326, %v325
  %v337 = vpack.c.b16 %v328, %v327
  %v338 = vpack.c.b16 %v330, %v329
  %347 = vmatpush.bf16.msra.mxu0 %v338
  %348 = vmatpush.bf16.msra.mxu0 %v337
  %349 = vmatpush.bf16.msra.mxu0 %v336
  %350 = vmatpush.bf16.msra.mxu0 %v335
  %351 = vmatpush.bf16.msra.mxu0 %v334
  %352 = vmatpush.bf16.msra.mxu0 %v333
  %353 = vmatpush.bf16.msra.mxu0 %v332
  %354 = vmatpush.bf16.msra.mxu0 %v331
  %355 = vmatmul.bf16.gmra.mxu0 %v235
  %v356 = vpop.f32.mrf.mxu0
  %v357 = vadd.f32 %v105, %v356
  %v358 = vpop.f32.mrf.mxu0
  %v359 = vadd.f32 %v105, %v358
  %360 = vmatmul.bf16.gmra.mxu0 %v236
  %v361 = vpop.f32.mrf.mxu0
  %v362 = vadd.f32 %v105, %v361
  %v363 = vpop.f32.mrf.mxu0
  %v364 = vadd.f32 %v105, %v363
  %365 = vmatmul.bf16.gmra.mxu0 %v237
  %v366 = vpop.f32.mrf.mxu0
  %v367 = vadd.f32 %v105, %v366
  %v368 = vpop.f32.mrf.mxu0
  %v369 = vadd.f32 %v105, %v368
  %370 = vmatmul.bf16.gmra.mxu0 %v238
  %v371 = vpop.f32.mrf.mxu0
  %v372 = vadd.f32 %v105, %v371
  %v373 = vpop.f32.mrf.mxu0
  %v374 = vadd.f32 %v105, %v373
  %375 = vmatmul.bf16.gmra.mxu0 %v239
  %v376 = vpop.f32.mrf.mxu0
  %v377 = vadd.f32 %v105, %v376
  %v378 = vpop.f32.mrf.mxu0
  %v379 = vadd.f32 %v105, %v378
  %380 = vmatmul.bf16.gmra.mxu0 %v240
  %v381 = vpop.f32.mrf.mxu0
  %v382 = vadd.f32 %v105, %v381
  %v383 = vpop.f32.mrf.mxu0
  %v384 = vadd.f32 %v105, %v383
  %385 = vmatmul.bf16.gmra.mxu0 %v241
  %v386 = vpop.f32.mrf.mxu0
  %v387 = vadd.f32 %v105, %v386
  %v388 = vpop.f32.mrf.mxu0
  %v389 = vadd.f32 %v105, %v388
  %390 = vmatmul.bf16.gmra.mxu0 %v242
  %v391 = vpop.f32.mrf.mxu0
  %v392 = vadd.f32 %v105, %v391
  %v393 = vpop.f32.mrf.mxu0
  %v394 = vadd.f32 %v105, %v393
  %395 = vmatmul.bf16.gmra.mxu0 %v243
  %v396 = vpop.f32.mrf.mxu0
  %v397 = vadd.f32 %v105, %v396
  %v398 = vpop.f32.mrf.mxu0
  %v399 = vadd.f32 %v105, %v398
  %400 = vmatmul.bf16.gmra.mxu0 %v244
  %v401 = vpop.f32.mrf.mxu0
  %v402 = vadd.f32 %v105, %v401
  %v403 = vpop.f32.mrf.mxu0
  %v404 = vadd.f32 %v105, %v403
  %405 = vmatmul.bf16.gmra.mxu0 %v245
  %v406 = vpop.f32.mrf.mxu0
  %v407 = vadd.f32 %v105, %v406
  %v408 = vpop.f32.mrf.mxu0
  %v409 = vadd.f32 %v105, %v408
  %410 = vmatmul.bf16.gmra.mxu0 %v246
  %v411 = vpop.f32.mrf.mxu0
  %v412 = vadd.f32 %v105, %v411
  %v413 = vpop.f32.mrf.mxu0
  %v414 = vadd.f32 %v105, %v413
  %415 = vmatmul.bf16.gmra.mxu0 %v247
  %v416 = vpop.f32.mrf.mxu0
  %v417 = vadd.f32 %v105, %v416
  %v418 = vpop.f32.mrf.mxu0
  %v419 = vadd.f32 %v105, %v418
  %420 = vmatmul.bf16.gmra.mxu0 %v248
  %v421 = vpop.f32.mrf.mxu0
  %v422 = vadd.f32 %v105, %v421
  %v423 = vpop.f32.mrf.mxu0
  %v424 = vadd.f32 %v105, %v423
  %425 = vmatmul.bf16.gmra.mxu0 %v249
  %v426 = vpop.f32.mrf.mxu0
  %v427 = vadd.f32 %v105, %v426
  %v428 = vpop.f32.mrf.mxu0
  %v429 = vadd.f32 %v105, %v428
  %430 = vmatmul.bf16.gmra.mxu0 %v250
  %v431 = vpop.f32.mrf.mxu0
  %v432 = vadd.f32 %v105, %v431
  %v433 = vpop.f32.mrf.mxu0
  %v434 = vadd.f32 %v105, %v433
  %435 = vmatmul.bf16.gmra.mxu0 %v251
  %v436 = vpop.f32.mrf.mxu0
  %v437 = vadd.f32 %v105, %v436
  %v438 = vpop.f32.mrf.mxu0
  %v439 = vadd.f32 %v105, %v438
  %440 = vmatmul.bf16.gmra.mxu0 %v252
  %v441 = vpop.f32.mrf.mxu0
  %v442 = vadd.f32 %v105, %v441
  %v443 = vpop.f32.mrf.mxu0
  %v444 = vadd.f32 %v105, %v443
  %445 = vmatmul.bf16.gmra.mxu0 %v253
  %v446 = vpop.f32.mrf.mxu0
  %v447 = vadd.f32 %v105, %v446
  %v448 = vpop.f32.mrf.mxu0
  %v449 = vadd.f32 %v105, %v448
  %450 = vmatmul.bf16.gmra.mxu0 %v254
  %v451 = vpop.f32.mrf.mxu0
  %v452 = vadd.f32 %v105, %v451
  %v453 = vpop.f32.mrf.mxu0
  %v454 = vadd.f32 %v105, %v453
  %455 = vmatmul.bf16.gmra.mxu0 %v255
  %v456 = vpop.f32.mrf.mxu0
  %v457 = vadd.f32 %v105, %v456
  %v458 = vpop.f32.mrf.mxu0
  %v459 = vadd.f32 %v105, %v458
  %460 = vmatmul.bf16.gmra.mxu0 %v256
  %v461 = vpop.f32.mrf.mxu0
  %v462 = vadd.f32 %v105, %v461
  %v463 = vpop.f32.mrf.mxu0
  %v464 = vadd.f32 %v105, %v463
  %465 = vmatmul.bf16.gmra.mxu0 %v257
  %v466 = vpop.f32.mrf.mxu0
  %v467 = vadd.f32 %v105, %v466
  %v468 = vpop.f32.mrf.mxu0
  %v469 = vadd.f32 %v105, %v468
  %470 = vmatmul.bf16.gmra.mxu0 %v258
  %v471 = vpop.f32.mrf.mxu0
  %v472 = vadd.f32 %v105, %v471
  %v473 = vpop.f32.mrf.mxu0
  %v474 = vadd.f32 %v105, %v473
  %475 = vmatmul.bf16.gmra.mxu0 %v259
  %v476 = vpop.f32.mrf.mxu0
  %v477 = vadd.f32 %v105, %v476
  %v478 = vpop.f32.mrf.mxu0
  %v479 = vadd.f32 %v105, %v478
  %480 = vmatmul.bf16.gmra.mxu0 %v260
  %v481 = vpop.f32.mrf.mxu0
  %v482 = vadd.f32 %v105, %v481
  %v483 = vpop.f32.mrf.mxu0
  %v484 = vadd.f32 %v105, %v483
  %485 = vmatmul.bf16.gmra.mxu0 %v261
  %v486 = vpop.f32.mrf.mxu0
  %v487 = vadd.f32 %v105, %v486
  %v488 = vpop.f32.mrf.mxu0
  %v489 = vadd.f32 %v105, %v488
  %490 = vmatmul.bf16.gmra.mxu0 %v262
  %v491 = vpop.f32.mrf.mxu0
  %v492 = vadd.f32 %v105, %v491
  %v493 = vpop.f32.mrf.mxu0
  %v494 = vadd.f32 %v105, %v493
  %495 = vmatmul.bf16.gmra.mxu0 %v263
  %v496 = vpop.f32.mrf.mxu0
  %v497 = vadd.f32 %v105, %v496
  %v498 = vpop.f32.mrf.mxu0
  %v499 = vadd.f32 %v105, %v498
  %500 = vmatmul.bf16.gmra.mxu0 %v264
  %v501 = vpop.f32.mrf.mxu0
  %v502 = vadd.f32 %v105, %v501
  %v503 = vpop.f32.mrf.mxu0
  %v504 = vadd.f32 %v105, %v503
  %505 = vmatmul.bf16.gmra.mxu0 %v265
  %v506 = vpop.f32.mrf.mxu0
  %v507 = vadd.f32 %v105, %v506
  %v508 = vpop.f32.mrf.mxu0
  %v509 = vadd.f32 %v105, %v508
  %510 = vmatmul.bf16.gmra.mxu0 %v266
  %v511 = vpop.f32.mrf.mxu0
  %v512 = vadd.f32 %v105, %v511
  %v513 = vpop.f32.mrf.mxu0
  %v514 = vadd.f32 %v105, %v513
  %515 = vdwg.mxu0
  %v516 = vmax.f32 %v357, 0.0
  %v517 = vmax.f32 %v359, 0.0
  %v518 = vmax.f32 %v362, 0.0
  %v519 = vmax.f32 %v364, 0.0
  %v520 = vmax.f32 %v367, 0.0
  %v521 = vmax.f32 %v369, 0.0
  %v522 = vmax.f32 %v372, 0.0
  %v523 = vmax.f32 %v374, 0.0
  %v524 = vmax.f32 %v377, 0.0
  %v525 = vmax.f32 %v379, 0.0
  %v526 = vmax.f32 %v382, 0.0
  %v527 = vmax.f32 %v384, 0.0
  %v528 = vmax.f32 %v387, 0.0
  %v529 = vmax.f32 %v389, 0.0
  %v530 = vmax.f32 %v392, 0.0
  %v531 = vmax.f32 %v394, 0.0
  %v532 = vmax.f32 %v397, 0.0
  %v533 = vmax.f32 %v399, 0.0
  %v534 = vmax.f32 %v402, 0.0
  %v535 = vmax.f32 %v404, 0.0
  %v536 = vmax.f32 %v407, 0.0
  %v537 = vmax.f32 %v409, 0.0
  %v538 = vmax.f32 %v412, 0.0
  %v539 = vmax.f32 %v414, 0.0
  %v540 = vmax.f32 %v417, 0.0
  %v541 = vmax.f32 %v419, 0.0
  %v542 = vmax.f32 %v422, 0.0
  %v543 = vmax.f32 %v424, 0.0
  %v544 = vmax.f32 %v427, 0.0
  %v545 = vmax.f32 %v429, 0.0
  %v546 = vmax.f32 %v432, 0.0
  %v547 = vmax.f32 %v434, 0.0
  %v548 = vmax.f32 %v437, 0.0
  %v549 = vmax.f32 %v439, 0.0
  %v550 = vmax.f32 %v442, 0.0
  %v551 = vmax.f32 %v444, 0.0
  %v552 = vmax.f32 %v447, 0.0
  %v553 = vmax.f32 %v449, 0.0
  %v554 = vmax.f32 %v452, 0.0
  %v555 = vmax.f32 %v454, 0.0
  %v556 = vmax.f32 %v457, 0.0
  %v557 = vmax.f32 %v459, 0.0
  %v558 = vmax.f32 %v462, 0.0
  %v559 = vmax.f32 %v464, 0.0
  %v560 = vmax.f32 %v467, 0.0
  %v561 = vmax.f32 %v469, 0.0
  %v562 = vmax.f32 %v472, 0.0
  %v563 = vmax.f32 %v474, 0.0
  %v564 = vmax.f32 %v477, 0.0
  %v565 = vmax.f32 %v479, 0.0
  %v566 = vmax.f32 %v482, 0.0
  %v567 = vmax.f32 %v484, 0.0
  %v568 = vmax.f32 %v487, 0.0
  %v569 = vmax.f32 %v489, 0.0
  %v570 = vmax.f32 %v492, 0.0
  %v571 = vmax.f32 %v494, 0.0
  %v572 = vmax.f32 %v497, 0.0
  %v573 = vmax.f32 %v499, 0.0
  %v574 = vmax.f32 %v502, 0.0
  %v575 = vmax.f32 %v504, 0.0
  %v576 = vmax.f32 %v507, 0.0
  %v577 = vmax.f32 %v509, 0.0
  %v578 = vmax.f32 %v512, 0.0
  %v579 = vmax.f32 %v514, 0.0
  %v580 = vld [vmem:[%s3] sm:$0xff]
  %v581 = vld [vmem:[%s3 + $0x8] sm:$0xff]
  %v582 = vpack.c.bf16 %v517, %v516
  %v583 = vpack.c.bf16 %v519, %v518
  %v584 = vpack.c.bf16 %v521, %v520
  %v585 = vpack.c.bf16 %v523, %v522
  %v586 = vpack.c.bf16 %v525, %v524
  %v587 = vpack.c.bf16 %v527, %v526
  %v588 = vpack.c.bf16 %v529, %v528
  %v589 = vpack.c.bf16 %v531, %v530
  %v590 = vpack.c.bf16 %v533, %v532
  %v591 = vpack.c.bf16 %v535, %v534
  %v592 = vpack.c.bf16 %v537, %v536
  %v593 = vpack.c.bf16 %v539, %v538
  %v594 = vpack.c.bf16 %v541, %v540
  %v595 = vpack.c.bf16 %v543, %v542
  %v596 = vpack.c.bf16 %v545, %v544
  %v597 = vpack.c.bf16 %v547, %v546
  %v598 = vpack.c.bf16 %v549, %v548
  %v599 = vpack.c.bf16 %v551, %v550
  %v600 = vpack.c.bf16 %v553, %v552
  %v601 = vpack.c.bf16 %v555, %v554
  %v602 = vpack.c.bf16 %v557, %v556
  %v603 = vpack.c.bf16 %v559, %v558
  %v604 = vpack.c.bf16 %v561, %v560
  %v605 = vpack.c.bf16 %v563, %v562
  %v606 = vpack.c.bf16 %v565, %v564
  %v607 = vpack.c.bf16 %v567, %v566
  %v608 = vpack.c.bf16 %v569, %v568
  %v609 = vpack.c.bf16 %v571, %v570
  %v610 = vpack.c.bf16 %v573, %v572
  %v611 = vpack.c.bf16 %v575, %v574
  %v612 = vpack.c.bf16 %v577, %v576
  %v613 = vpack.c.bf16 %v579, %v578
  %v616 = vunpack.c.l.b16 %v580
  %v617 = vunpack.c.h.b16 %v580
  %v618 = vunpack.c.l.b16 %v581
  %v619 = vunpack.c.h.b16 %v581
  %v620 = vpack.c.b16 %v616, %v616
  %v621 = vpack.c.b16 %v617, %v617
  %v622 = vpack.c.b16 %v618, %v618
  %v623 = vpack.c.b16 %v619, %v619
  %628 = vmatpush.bf16.msra.mxu0 %v589
  %629 = vmatpush.bf16.msra.mxu0 %v588
  %630 = vmatpush.bf16.msra.mxu0 %v587
  %631 = vmatpush.bf16.msra.mxu0 %v586
  %632 = vmatpush.bf16.msra.mxu0 %v585
  %633 = vmatpush.bf16.msra.mxu0 %v584
  %634 = vmatpush.bf16.msra.mxu0 %v583
  %635 = vmatpush.bf16.msra.mxu0 %v582
  %636 = vmatmul.bf16.gmra.mxu0 %v620
  %v637 = vpop.f32.mrf.mxu0
  %v638 = vadd.f32 0.0, %v637
  %v639 = vpop.f32.mrf.mxu0
  %640 = vdwg.mxu0
  %641 = vmatpush.bf16.msra.mxu0 %v597
  %642 = vmatpush.bf16.msra.mxu0 %v596
  %643 = vmatpush.bf16.msra.mxu0 %v595
  %644 = vmatpush.bf16.msra.mxu0 %v594
  %645 = vmatpush.bf16.msra.mxu0 %v593
  %646 = vmatpush.bf16.msra.mxu0 %v592
  %647 = vmatpush.bf16.msra.mxu0 %v591
  %648 = vmatpush.bf16.msra.mxu0 %v590
  %649 = vmatmul.bf16.gmra.mxu0 %v621
  %v650 = vpop.f32.mrf.mxu0
  %v651 = vadd.f32 %v638, %v650
  %v652 = vpop.f32.mrf.mxu0
  %653 = vdwg.mxu0
  %654 = vmatpush.bf16.msra.mxu0 %v605
  %655 = vmatpush.bf16.msra.mxu0 %v604
  %656 = vmatpush.bf16.msra.mxu0 %v603
  %657 = vmatpush.bf16.msra.mxu0 %v602
  %658 = vmatpush.bf16.msra.mxu0 %v601
  %659 = vmatpush.bf16.msra.mxu0 %v600
  %660 = vmatpush.bf16.msra.mxu0 %v599
  %661 = vmatpush.bf16.msra.mxu0 %v598
  %662 = vmatmul.bf16.gmra.mxu0 %v622
  %v663 = vpop.f32.mrf.mxu0
  %v664 = vadd.f32 %v651, %v663
  %v665 = vpop.f32.mrf.mxu0
  %666 = vdwg.mxu0
  %667 = vmatpush.bf16.msra.mxu0 %v613
  %668 = vmatpush.bf16.msra.mxu0 %v612
  %669 = vmatpush.bf16.msra.mxu0 %v611
  %670 = vmatpush.bf16.msra.mxu0 %v610
  %671 = vmatpush.bf16.msra.mxu0 %v609
  %672 = vmatpush.bf16.msra.mxu0 %v608
  %673 = vmatpush.bf16.msra.mxu0 %v607
  %674 = vmatpush.bf16.msra.mxu0 %v606
  %675 = vmatmul.bf16.gmra.mxu0 %v623
  %v676 = vpop.f32.mrf.mxu0
  %v677 = vadd.f32 %v664, %v676
  %v678 = vpop.f32.mrf.mxu0
  %679 = vdwg.mxu0
  %v680 = vpack.c.bf16 %v677, %v677
  %v681 = vld [vmem:[%s4] sm:$0xf]
  %v682 = vld [vmem:[%s4 + $0x4] sm:$0xf]
  %v683 = vld [vmem:[%s4 + $0x8] sm:$0xf]
  %v684 = vld [vmem:[%s4 + $0xc] sm:$0xf]
  %v685 = vld [vmem:[%s4 + $0x10] sm:$0xf]
  %v686 = vld [vmem:[%s4 + $0x14] sm:$0xf]
  %v687 = vld [vmem:[%s4 + $0x18] sm:$0xf]
  %v688 = vld [vmem:[%s4 + $0x1c] sm:$0xf]
  %v689 = vld [vmem:[%s4 + $0x20] sm:$0xf]
  %v690 = vld [vmem:[%s4 + $0x24] sm:$0xf]
  %v691 = vld [vmem:[%s4 + $0x28] sm:$0xf]
  %v692 = vld [vmem:[%s4 + $0x2c] sm:$0xf]
  %v693 = vld [vmem:[%s4 + $0x30] sm:$0xf]
  %v694 = vld [vmem:[%s4 + $0x34] sm:$0xf]
  %v695 = vld [vmem:[%s4 + $0x38] sm:$0xf]
  %v696 = vld [vmem:[%s4 + $0x3c] sm:$0xf]
  %v697 = vld [vmem:[%s5] sm:$0x1]
  %v699 = vperm.slane %v697, 0
  %v717 = vunpack.c.l.b16 %v681
  %v718 = vunpack.c.l.b16 %v682
  %v719 = vunpack.c.l.b16 %v683
  %v720 = vunpack.c.l.b16 %v684
  %v721 = vunpack.c.l.b16 %v685
  %v722 = vunpack.c.l.b16 %v686
  %v723 = vunpack.c.l.b16 %v687
  %v724 = vunpack.c.l.b16 %v688
  %v725 = vunpack.c.l.b16 %v689
  %v726 = vunpack.c.l.b16 %v690
  %v727 = vunpack.c.l.b16 %v691
  %v728 = vunpack.c.l.b16 %v692
  %v729 = vunpack.c.l.b16 %v693
  %v730 = vunpack.c.l.b16 %v694
  %v731 = vunpack.c.l.b16 %v695
  %v732 = vunpack.c.l.b16 %v696
  %v733 = vpack.c.b16 %v718, %v717
  %v734 = vpack.c.b16 %v720, %v719
  %v735 = vpack.c.b16 %v722, %v721
  %v736 = vpack.c.b16 %v724, %v723
  %v737 = vpack.c.b16 %v726, %v725
  %v738 = vpack.c.b16 %v728, %v727
  %v739 = vpack.c.b16 %v730, %v729
  %v740 = vpack.c.b16 %v732, %v731
  %749 = vmatpush.bf16.msra.mxu0 %v740
  %750 = vmatpush.bf16.msra.mxu0 %v739
  %751 = vmatpush.bf16.msra.mxu0 %v738
  %752 = vmatpush.bf16.msra.mxu0 %v737
  %753 = vmatpush.bf16.msra.mxu0 %v736
  %754 = vmatpush.bf16.msra.mxu0 %v735
  %755 = vmatpush.bf16.msra.mxu0 %v734
  %756 = vmatpush.bf16.msra.mxu0 %v733
  %757 = vmatmul.bf16.gmra.mxu0 %v680
  %v758 = vpop.f32.mrf.mxu0
  %v759 = vadd.f32 %v699, %v758
  %v760 = vpop.f32.mrf.mxu0
  %761 = vdwg.mxu0
  %762 = vst [vmem:[%s6] sm:$0xff] %v759
  // Predicated region
  $region26: #{pytorch_model_forward.1} parent=0 // pred_check
    _
  $region27: #{pytorch_model_forward.1} parent=0 // pred_check_branch
    %764 = sbr.rel (0) target = $region29
  $region28: #{pytorch_model_forward.1} parent=0 // pred_region
    _
  $region29: #{pytorch_model_forward.1} parent=0 // pred_fallthru
    _
  // Predicated region
  $region30: #{pytorch_model_forward.1} parent=0 // pred_check
    _
  $region31: #{pytorch_model_forward.1} parent=0 // pred_check_branch
    %766 = sbr.rel (0) target = $region33
  $region32: #{pytorch_model_forward.1} parent=0 // pred_region
    _
  $region33: #{pytorch_model_forward.1} parent=0 // pred_fallthru
    _

</llo_original>
